<compile_context>
chip_gen: v7x
topology: tpu7x:2x2x1
jax: 0.10.0
libtpu: 0.0.40
codegen_flags: <defaults>
</compile_context>

<pallas_src>
import jax
import jax.numpy as jnp
import numpy as np
from jax import lax
from jax.experimental import pallas as pl
from jax.experimental.pallas import tpu as pltpu


def dgi_heter_kernel(h1_ref, h2_ref, prompt_ref, w_ref, counts_ref, inv_ref,
                     bias_ref, pos_ref, neg_ref):
    t = pl.program_id(0)
    n = counts_ref[t]                      # true node count for this type (SMEM, i32)
    inv_n = inv_ref[t]                     # 1 / max(n, 1)                  (SMEM, f32)
    b = bias_ref[0]                        # bilinear bias                  (SMEM, f32)

    h1 = h1_ref[...]                       # [N_pad, H] bf16 (clean rgcn output)
    h2 = h2_ref[...]                       # [N_pad, H] bf16 (corrupted rgcn output)
    n_pad = h1.shape[0]

    # Positive-row lane mask [1, N_pad]; bf16 so the readout runs on the MXU.
    col = lax.broadcasted_iota(jnp.int32, (1, n_pad), 1)
    mask = jnp.where(col < n, 1.0, 0.0).astype(jnp.bfloat16)

    # AvgReadout over the true h_1 rows as an MXU matvec, f32 accumulation.
    s = lax.dot_general(mask, h1, (((1,), (0,)), ((), ())),
                        preferred_element_type=jnp.float32)            # [1, H]
    c = jax.nn.sigmoid(s * inv_n)                                        # [1, H] f32

    # wc[0, j] = sum_k W[j, k] * c[0, k]  (contract against W's dim 1 -> no transpose)
    wc = lax.dot_general(c, w_ref[...], (((1,), (1,)), ((), ())),
                         preferred_element_type=jnp.float32)             # [1, H]

    # Fold the prompt into the summary vector: (h*p) @ (W@c) == h @ (p ⊙ (W@c)).
    pwc = (prompt_ref[...].astype(jnp.float32) * wc).astype(jnp.bfloat16)  # [1, H]

    # Bilinear scores for all rows as lane-dense MXU matvecs: [1, H] · [N_pad, H]^T.
    pos_ref[...] = lax.dot_general(pwc, h1, (((1,), (1,)), ((), ())),
                                   preferred_element_type=jnp.float32) + b
    neg_ref[...] = lax.dot_general(pwc, h2, (((1,), (1,)), ((), ())),
                                   preferred_element_type=jnp.float32) + b


def dgi_heter_batched(h1_slab, h2_slab, prompts, w, counts, inv_counts, bias):
    """h*_slab: [T, N_pad, H] bf16; prompts: [T, 1, H] bf16; w: [H, H] f32;
    counts: [T] i32; inv_counts: [T] f32; bias: [1] f32.
    Returns (pos, neg) each [T, 1, N_pad] f32 (lane-dense)."""
    num_types, n_pad, hidden = h1_slab.shape
    grid_spec = pltpu.PrefetchScalarGridSpec(
        num_scalar_prefetch=0,
        grid=(num_types,),
        in_specs=[
            pl.BlockSpec((None, n_pad, hidden), lambda t: (t, 0, 0)),   # h1
            pl.BlockSpec((None, n_pad, hidden), lambda t: (t, 0, 0)),   # h2
            pl.BlockSpec((None, 1, hidden), lambda t: (t, 0, 0)),       # prompt
            pl.BlockSpec((hidden, hidden), lambda t: (0, 0)),           # W
            pl.BlockSpec(memory_space=pltpu.MemorySpace.SMEM),          # counts
            pl.BlockSpec(memory_space=pltpu.MemorySpace.SMEM),          # 1/counts
            pl.BlockSpec(memory_space=pltpu.MemorySpace.SMEM),          # bias
        ],
        out_specs=[
            pl.BlockSpec((None, 1, n_pad), lambda t: (t, 0, 0)),        # sc_1 (pos)
            pl.BlockSpec((None, 1, n_pad), lambda t: (t, 0, 0)),        # sc_2 (neg)
        ],
    )
    return pl.pallas_call(
        dgi_heter_kernel,
        out_shape=(jax.ShapeDtypeStruct((num_types, 1, n_pad), jnp.float32),
                   jax.ShapeDtypeStruct((num_types, 1, n_pad), jnp.float32)),
        grid_spec=grid_spec,
        compiler_params=pltpu.CompilerParams(dimension_semantics=("parallel",)),
    )(h1_slab, h2_slab, prompts, w, counts, inv_counts, bias)


@jax.jit
def dgi_heter_forward(h_1, h_2, prompts, w, b):
    """Dict-of-node-types forward, mirrors DGI_heter.forward (rgcn outputs given).

    Staging (bf16 cast + pad + stack) happens under the same jit as the
    pallas_call so it fuses into one on-device op instead of a separate HBM
    restaging pass.
    """
    keys = list(h_1.keys())
    hidden = w.shape[0]
    counts = [int(h_1[k].shape[0]) for k in keys]
    # Pad the node axis to a lane multiple so per-type score rows are lane-dense.
    n_pad = max(128, ((max(counts) + 127) // 128) * 128)

    def pad_rows(x):
        return jnp.pad(x.astype(jnp.bfloat16), ((0, n_pad - x.shape[0]), (0, 0)))

    h1_slab = jnp.stack([pad_rows(h_1[k]) for k in keys])                 # [T, Np, H]
    h2_slab = jnp.stack([pad_rows(h_2[k]) for k in keys])                 # [T, Np, H]
    prompt_arr = jnp.stack(
        [prompts[k].astype(jnp.bfloat16).reshape(1, hidden) for k in keys])  # [T,1,H]
    counts_arr = jnp.asarray(counts, dtype=jnp.int32)                     # [T]
    inv_counts = jnp.asarray([1.0 / max(c, 1) for c in counts], jnp.float32)  # [T]
    bias = jnp.reshape(b, (1,)).astype(jnp.float32)                       # [1]

    pos, neg = dgi_heter_batched(h1_slab, h2_slab, prompt_arr,
                                 w.astype(jnp.float32), counts_arr,
                                 inv_counts, bias)                        # [T,1,Np] x2

    result = {}
    for t, k in enumerate(keys):
        n = counts[t]
        # row order matches torch.cat((sc_1, sc_2), 0)
        result[k] = jnp.concatenate([pos[t, 0, :n], neg[t, 0, :n]])
    return result


def _ref_per_type(h_pos, h_neg, prompt, w, b):
    """Pure-JAX f32 reference on the same bf16-rounded inputs the kernel stores."""
    hp = h_pos.astype(jnp.bfloat16).astype(jnp.float32)
    hn = h_neg.astype(jnp.bfloat16).astype(jnp.float32)
    p = prompt.astype(jnp.bfloat16).astype(jnp.float32)
    c = jax.nn.sigmoid(jnp.mean(hp, axis=0))
    wc = w @ c
    sc1 = (hp * p) @ wc + b[0]
    sc2 = (hn * p) @ wc + b[0]
    return jnp.concatenate([sc1, sc2])


def _xavier_uniform(key, shape, fan_in, fan_out):
    bound = np.sqrt(6.0 / (fan_in + fan_out))
    return jax.random.uniform(key, shape, jnp.float32, -bound, bound)


if __name__ == "__main__":
    hidden_dim = 32
    ntypes = ("gene", "drug", "disease")
    num_nodes = {"gene": 16, "drug": 8, "disease": 8}

    root = jax.random.PRNGKey(0)
    k_h1, k_h2, k_prompt, k_w = jax.random.split(root, 4)

    # simulated rgcn outputs (clean / corrupted) per node type
    h_1, h_2, prompts = {}, {}, {}
    for i, ntype in enumerate(ntypes):
        n = num_nodes[ntype]
        h_1[ntype] = jax.random.normal(jax.random.fold_in(k_h1, i), (n, hidden_dim), jnp.float32)
        h_2[ntype] = jax.random.normal(jax.random.fold_in(k_h2, i), (n, hidden_dim), jnp.float32)
        prompts[ntype] = _xavier_uniform(jax.random.fold_in(k_prompt, i),
                                         (1, hidden_dim), 1, hidden_dim)

    # HeteroDiscriminator: nn.Bilinear(hidden_dim, hidden_dim, 1)
    w_bilinear = _xavier_uniform(k_w, (hidden_dim, hidden_dim), hidden_dim, hidden_dim)
    b_bilinear = jnp.asarray([0.25], jnp.float32)

    out = dgi_heter_forward(h_1, h_2, prompts, w_bilinear, b_bilinear)
    out = jax.tree_util.tree_map(jax.block_until_ready, out)

    # correctness check against pure-JAX reference (bf16 storage, f32 compute)
    for ntype in ntypes:
        ref = _ref_per_type(h_1[ntype], h_2[ntype], prompts[ntype], w_bilinear, b_bilinear)
        assert out[ntype].shape == (2 * num_nodes[ntype],)
        np.testing.assert_allclose(np.asarray(out[ntype]), np.asarray(ref),
                                   rtol=2e-2, atol=2e-2)

    print("KERNEL_OK")
</pallas_src>

<mosaic_0001>
module attributes {stable_mosaic.version = 11 : i64} {
  func.func @dgi_heter_kernel(%arg0: i32, %arg1: memref<1x128x32xbf16, #tpu.memory_space<vmem>>, %arg2: memref<1x128x32xbf16, #tpu.memory_space<vmem>>, %arg3: memref<1x1x32xbf16, #tpu.memory_space<vmem>>, %arg4: memref<32x32xf32, #tpu.memory_space<vmem>>, %arg5: memref<3xi32, #tpu.memory_space<smem>>, %arg6: memref<3xf32, #tpu.memory_space<smem>>, %arg7: memref<1xf32, #tpu.memory_space<smem>>, %arg8: memref<1x1x128xf32, #tpu.memory_space<vmem>>, %arg9: memref<1x1x128xf32, #tpu.memory_space<vmem>>) attributes {dimension_semantics = [#tpu.dimension_semantics<parallel>], iteration_bounds = array<i64: 3>, scalar_prefetch = 0 : i64, scratch_operands = 0 : i64, tpu.core_type = #tpu.core_type<tc>, window_params = [{transform_indices = @transform_0, window_bounds = array<i64: 1, 128, 32>}, {transform_indices = @transform_1, window_bounds = array<i64: 1, 128, 32>}, {transform_indices = @transform_2, window_bounds = array<i64: 1, 1, 32>}, {pipeline_mode = #tpu.pipeline_mode<synchronous>, transform_indices = @transform_3, window_bounds = array<i64: 32, 32>}, {transform_indices = @transform_4, window_bounds = array<i64: 3>}, {transform_indices = @transform_5, window_bounds = array<i64: 3>}, {transform_indices = @transform_6, window_bounds = array<i64: 1>}, {transform_indices = @transform_7, window_bounds = array<i64: 1, 1, 128>}, {transform_indices = @transform_8, window_bounds = array<i64: 1, 1, 128>}]} {
    %0 = arith.index_cast %arg0 : i32 to index
    %1 = memref.load %arg5[%0] : memref<3xi32, #tpu.memory_space<smem>>
    %2 = arith.index_cast %arg0 : i32 to index
    %3 = memref.load %arg6[%2] : memref<3xf32, #tpu.memory_space<smem>>
    %c0 = arith.constant 0 : index
    %4 = memref.load %arg7[%c0] : memref<1xf32, #tpu.memory_space<smem>>
    %c0_0 = arith.constant 0 : index
    %c0_1 = arith.constant 0 : index
    %c0_2 = arith.constant 0 : index
    %5 = vector.load %arg1[%c0_0, %c0_1, %c0_2] : memref<1x128x32xbf16, #tpu.memory_space<vmem>>, vector<1x128x32xbf16>
    %6 = vector.shape_cast %5 : vector<1x128x32xbf16> to vector<128x32xbf16>
    %c0_3 = arith.constant 0 : index
    %c0_4 = arith.constant 0 : index
    %c0_5 = arith.constant 0 : index
    %7 = vector.load %arg2[%c0_3, %c0_4, %c0_5] : memref<1x128x32xbf16, #tpu.memory_space<vmem>>, vector<1x128x32xbf16>
    %8 = vector.shape_cast %7 : vector<1x128x32xbf16> to vector<128x32xbf16>
    %9 = tpu.iota {dimensions = array<i32: 1>} : vector<1x128xi32>
    %10 = vector.broadcast %1 : i32 to vector<1x128xi32>
    %11 = arith.cmpi slt, %9, %10 : vector<1x128xi32>
    %cst = arith.constant 1.000000e+00 : f32
    %cst_6 = arith.constant 0.000000e+00 : f32
    %12 = vector.broadcast %cst : f32 to vector<1x128xf32>
    %13 = vector.broadcast %cst_6 : f32 to vector<1x128xf32>
    %14 = arith.select %11, %12, %13 : vector<1x128xi1>, vector<1x128xf32>
    %15 = arith.truncf %14 : vector<1x128xf32> to vector<1x128xbf16>
    %cst_7 = arith.constant dense<0.000000e+00> : vector<1x32xf32>
    %16 = tpu.matmul %15, %6, %cst_7 {dimension_numbers = #tpu.dot_dimension_numbers<[1], [0], [0], [1], [0, 0, 1, 1], [], []>} : vector<1x128xbf16>, vector<128x32xbf16>, vector<1x32xf32> -> vector<1x32xf32>
    %17 = vector.broadcast %3 : f32 to vector<1x32xf32>
    %18 = arith.mulf %16, %17 : vector<1x32xf32>
    %19 = arith.negf %18 : vector<1x32xf32>
    %20 = math.exp %19 : vector<1x32xf32>
    %cst_8 = arith.constant 1.000000e+00 : f32
    %21 = vector.broadcast %cst_8 : f32 to vector<1x32xf32>
    %22 = arith.addf %21, %20 : vector<1x32xf32>
    %23 = arith.divf %21, %22 : vector<1x32xf32>
    %c0_9 = arith.constant 0 : index
    %c0_10 = arith.constant 0 : index
    %24 = vector.load %arg4[%c0_9, %c0_10] : memref<32x32xf32, #tpu.memory_space<vmem>>, vector<32x32xf32>
    %cst_11 = arith.constant dense<0.000000e+00> : vector<1x32xf32>
    %25 = tpu.matmul %23, %24, %cst_11 {dimension_numbers = #tpu.dot_dimension_numbers<[1], [1], [0], [0], [0, 0, 1, 0], [], []>} : vector<1x32xf32>, vector<32x32xf32>, vector<1x32xf32> -> vector<1x32xf32>
    %c0_12 = arith.constant 0 : index
    %c0_13 = arith.constant 0 : index
    %c0_14 = arith.constant 0 : index
    %26 = vector.load %arg3[%c0_12, %c0_13, %c0_14] : memref<1x1x32xbf16, #tpu.memory_space<vmem>>, vector<1x1x32xbf16>
    %27 = vector.shape_cast %26 : vector<1x1x32xbf16> to vector<1x32xbf16>
    %28 = arith.extf %27 : vector<1x32xbf16> to vector<1x32xf32>
    %29 = arith.mulf %28, %25 : vector<1x32xf32>
    %30 = arith.truncf %29 : vector<1x32xf32> to vector<1x32xbf16>
    %cst_15 = arith.constant dense<0.000000e+00> : vector<1x128xf32>
    %31 = tpu.matmul %30, %6, %cst_15 {dimension_numbers = #tpu.dot_dimension_numbers<[1], [1], [0], [0], [0, 0, 1, 0], [], []>} : vector<1x32xbf16>, vector<128x32xbf16>, vector<1x128xf32> -> vector<1x128xf32>
    %32 = vector.broadcast %4 : f32 to vector<1x128xf32>
    %33 = arith.addf %31, %32 : vector<1x128xf32>
    %c0_16 = arith.constant 0 : index
    %c0_17 = arith.constant 0 : index
    %c0_18 = arith.constant 0 : index
    %34 = vector.load %arg8[%c0_16, %c0_17, %c0_18] : memref<1x1x128xf32, #tpu.memory_space<vmem>>, vector<1x1x128xf32>
    %35 = vector.shape_cast %34 : vector<1x1x128xf32> to vector<1x128xf32>
    %36 = vector.shape_cast %33 : vector<1x128xf32> to vector<1x1x128xf32>
    tpu.vector_store %arg8[%c0_16, %c0_17, %c0_18], %36 {strides = array<i32>} : memref<1x1x128xf32, #tpu.memory_space<vmem>>, vector<1x1x128xf32>,
    %cst_19 = arith.constant dense<0.000000e+00> : vector<1x128xf32>
    %37 = tpu.matmul %30, %8, %cst_19 {dimension_numbers = #tpu.dot_dimension_numbers<[1], [1], [0], [0], [0, 0, 1, 0], [], []>} : vector<1x32xbf16>, vector<128x32xbf16>, vector<1x128xf32> -> vector<1x128xf32>
    %38 = vector.broadcast %4 : f32 to vector<1x128xf32>
    %39 = arith.addf %37, %38 : vector<1x128xf32>
    %c0_20 = arith.constant 0 : index
    %c0_21 = arith.constant 0 : index
    %c0_22 = arith.constant 0 : index
    %40 = vector.load %arg9[%c0_20, %c0_21, %c0_22] : memref<1x1x128xf32, #tpu.memory_space<vmem>>, vector<1x1x128xf32>
    %41 = vector.shape_cast %40 : vector<1x1x128xf32> to vector<1x128xf32>
    %42 = vector.shape_cast %39 : vector<1x128xf32> to vector<1x1x128xf32>
    tpu.vector_store %arg9[%c0_20, %c0_21, %c0_22], %42 {strides = array<i32>} : memref<1x1x128xf32, #tpu.memory_space<vmem>>, vector<1x1x128xf32>,
    return
  }
  func.func @transform_0(%arg0: i32) -> (i32, i32, i32) {
    %c0_i32 = arith.constant 0 : i32
    %c0_i32_0 = arith.constant 0 : i32
    %c0_i32_1 = arith.constant 0 : i32
    return %arg0, %c0_i32, %c0_i32_0 : i32, i32, i32
  }
  func.func @transform_1(%arg0: i32) -> (i32, i32, i32) {
    %c0_i32 = arith.constant 0 : i32
    %c0_i32_0 = arith.constant 0 : i32
    %c0_i32_1 = arith.constant 0 : i32
    return %arg0, %c0_i32, %c0_i32_0 : i32, i32, i32
  }
  func.func @transform_2(%arg0: i32) -> (i32, i32, i32) {
    %c0_i32 = arith.constant 0 : i32
    %c0_i32_0 = arith.constant 0 : i32
    %c0_i32_1 = arith.constant 0 : i32
    return %arg0, %c0_i32, %c0_i32_0 : i32, i32, i32
  }
  func.func @transform_3(%arg0: i32) -> (i32, i32) {
    %c0_i32 = arith.constant 0 : i32
    %c0_i32_0 = arith.constant 0 : i32
    %c0_i32_1 = arith.constant 0 : i32
    return %c0_i32, %c0_i32_0 : i32, i32
  }
  func.func @transform_4(%arg0: i32) -> i32 {
    %c0_i32 = arith.constant 0 : i32
    %c0_i32_0 = arith.constant 0 : i32
    return %c0_i32 : i32
  }
  func.func @transform_5(%arg0: i32) -> i32 {
    %c0_i32 = arith.constant 0 : i32
    %c0_i32_0 = arith.constant 0 : i32
    return %c0_i32 : i32
  }
  func.func @transform_6(%arg0: i32) -> i32 {
    %c0_i32 = arith.constant 0 : i32
    %c0_i32_0 = arith.constant 0 : i32
    return %c0_i32 : i32
  }
  func.func @transform_7(%arg0: i32) -> (i32, i32, i32) {
    %c0_i32 = arith.constant 0 : i32
    %c0_i32_0 = arith.constant 0 : i32
    %c0_i32_1 = arith.constant 0 : i32
    return %arg0, %c0_i32, %c0_i32_0 : i32, i32, i32
  }
  func.func @transform_8(%arg0: i32) -> (i32, i32, i32) {
    %c0_i32 = arith.constant 0 : i32
    %c0_i32_0 = arith.constant 0 : i32
    %c0_i32_1 = arith.constant 0 : i32
    return %arg0, %c0_i32, %c0_i32_0 : i32, i32, i32
  }
}

</mosaic_0001>

<llo_original>
// kernel: dgi_heter_forward.1
$region0: #{dgi_heter_forward.1}
  #allocation0 [shape = 'u32[]', space=smem, size = 0x4, offset = 0x4, fixed_abs, tag = 'smem constant byte address 0x4 - core index']
  #allocation1 [shape = 'u32[144,128]{1,0:T(1,128)}', space=vmem, size = 0x12000, scoped, tag = 'internal scratch']
  #allocation2 [shape = 'f32[1]{0:T(128)S(6)}', space=smem, size = 0x200, scoped, tag = 'scoped memory for dgi_heter_forward.1']
  %s0 = inlined_call_operand.vmem [shape: bf16[3,128,32], index: 0, kind: input, shape index: {}]
  %s1 = inlined_call_operand.vmem [shape: bf16[3,128,32], index: 1, kind: input, shape index: {}]
  %s2 = inlined_call_operand.vmem [shape: bf16[3,1,32], index: 2, kind: input, shape index: {}]
  %s3 = inlined_call_operand.vmem [shape: f32[32,32], index: 3, kind: input, shape index: {}]
  %s4 = inlined_call_operand.vmem [shape: s32[3], index: 4, kind: input, shape index: {}]
  %s5 = inlined_call_operand.vmem [shape: f32[3], index: 5, kind: input, shape index: {}]
  %s6 = inlined_call_operand.<no memory space> [shape: f32[1], index: 6, kind: input, shape index: {}]
  %s7 = inlined_call_operand.vmem [shape: f32[3,1,128], index: 7, kind: output, shape index: {0}]
  %s8 = inlined_call_operand.vmem [shape: f32[3,1,128], index: 8, kind: output, shape index: {1}]
  %9 = xla_tuple %s7, %s8
  %s10 = sld [smem:[#allocation0]]
  $region77: #{dgi_heter_forward.1} parent=0
    _
  %s12 = ssub.s32 1, %s10
  %s13 = scalar_select 0, %s12, %s10
  %14 = sst [smem:[#allocation2]] %s6
  $region1: #{dgi_heter_forward.1} parent=0
    #allocation3 [shape = 'u8[512]{0}', space=smem, size = 0x200, scoped, tag = 'input window, operand 4, single buffered']
    #allocation4 [shape = 's32[2]{0}', space=sflag, size = 0x8, scoped, tag = 'scoped memory for dgi_heter_forward.1']
    #allocation5 [shape = 'u8[512]{0}', space=smem, size = 0x200, scoped, tag = 'input window, operand 5, single buffered']
    #allocation6 [shape = 's32[1]{0}', space=sflag, size = 0x4, scoped, tag = 'scoped memory for dgi_heter_forward.1']
    %15 = vsyncpa [#allocation4], 0
    %16 = vsyncpa [#allocation6], 0
    loop: start=0, step=1, limit=5
    $region2: #{dgi_heter_forward.1} parent=1 // loop_pre_header
      _
    $region3: #{dgi_heter_forward.1} parent=1 // loop_header
      %s18 = sphi 0, %s22
      %p19 = scmp.ge.s32.totalorder %s18, 5
      %s28 = sphi 0, %s30
      %s31 = sphi 0, %s28
      %s32 = sphi 0, %s31
      %s48 = sphi 0, %s32
      %s54 = sphi 0, %s56
      %s57 = sphi 0, %s54
      %s58 = sphi 0, %s57
      %s74 = sphi 0, %s58
      %s80 = sphi 0, %s82
      %s83 = sphi 0, %s80
      %s84 = sphi 0, %s83
      %s100 = sphi 0, %s84
      %s104 = sphi 0, %s104
      %s106 = sphi 0, %s104
      %s107 = sphi 0, %s106
      %s121 = sphi 0, %s107
      %s125 = sphi 0, %s125
      %s127 = sphi 0, %s125
      %s128 = sphi 0, %s127
      %s142 = sphi 0, %s128
      %s146 = sphi 0, %s146
      %s148 = sphi 0, %s146
      %s149 = sphi 0, %s148
      %s163 = sphi 0, %s149
      %s167 = sphi 0, %s167
      %s169 = sphi 0, %s167
      %s170 = sphi 0, %s169
      %s184 = sphi 0, %s170
      %s190 = sphi 0, %s192
      %s193 = sphi 0, %s190
      %s194 = sphi 0, %s193
      %s210 = sphi 0, %s194
      %s216 = sphi 0, %s218
      %s219 = sphi 0, %s216
      %s220 = sphi 0, %s219
      %s236 = sphi 0, %s220
    $region4: #{dgi_heter_forward.1} parent=1 // loop_header_branch
      %21 = sbr.rel (%p19) target = $region8
    $region5: #{dgi_heter_forward.1} parent=1 // loop_body
      %s23 = ssub.s32 %s18, 1
      %s24 = ssub.s32 %s18, 2
      %s25 = sadd.s32 %s18, 1
      %s26 = ssub.s32 %s18, %s25
      %p27 = scmp.eq.s32.totalorder %s26, 0
      %s29 = sadd.s32 %s28, 1
      %s30 = scalar_select %p27, %s28, %s29
      %p33 = pneg %p27
      %p34 = scmp.eq.s32.totalorder %s18, 2
      %p35 = por %p33, %p34
      %p36 = scmp.ne.s32.totalorder %s28, %s31
      %p37 = scmp.eq.s32.totalorder %s18, 0
      %p38 = por %p36, %p37
      %p39 = scmp.ne.s32.totalorder %s28, %s31
      %p40 = scmp.eq.s32.totalorder %s23, 2
      %p41 = por %p39, %p40
      %p42 = scmp.ne.s32.totalorder %s31, %s32
      %p43 = scmp.eq.s32.totalorder %s23, 0
      %p44 = por %p42, %p43
      %p45 = scmp.ne.s32.totalorder %s31, %s32
      %p46 = scmp.eq.s32.totalorder %s24, 2
      %p47 = por %p45, %p46
      %p49 = scmp.ne.s32.totalorder %s32, %s48
      %p50 = scmp.eq.s32.totalorder %s24, 0
      %p51 = por %p49, %p50
      %s52 = ssub.s32 %s18, %s25
      %p53 = scmp.eq.s32.totalorder %s52, 0
      %s55 = sadd.s32 %s54, 1
      %s56 = scalar_select %p53, %s54, %s55
      %p59 = pneg %p53
      %p60 = scmp.eq.s32.totalorder %s18, 2
      %p61 = por %p59, %p60
      %p62 = scmp.ne.s32.totalorder %s54, %s57
      %p63 = scmp.eq.s32.totalorder %s18, 0
      %p64 = por %p62, %p63
      %p65 = scmp.ne.s32.totalorder %s54, %s57
      %p66 = scmp.eq.s32.totalorder %s23, 2
      %p67 = por %p65, %p66
      %p68 = scmp.ne.s32.totalorder %s57, %s58
      %p69 = scmp.eq.s32.totalorder %s23, 0
      %p70 = por %p68, %p69
      %p71 = scmp.ne.s32.totalorder %s57, %s58
      %p72 = scmp.eq.s32.totalorder %s24, 2
      %p73 = por %p71, %p72
      %p75 = scmp.ne.s32.totalorder %s58, %s74
      %p76 = scmp.eq.s32.totalorder %s24, 0
      %p77 = por %p75, %p76
      %s78 = ssub.s32 %s18, %s25
      %p79 = scmp.eq.s32.totalorder %s78, 0
      %s81 = sadd.s32 %s80, 1
      %s82 = scalar_select %p79, %s80, %s81
      %p85 = pneg %p79
      %p86 = scmp.eq.s32.totalorder %s18, 2
      %p87 = por %p85, %p86
      %p88 = scmp.ne.s32.totalorder %s80, %s83
      %p89 = scmp.eq.s32.totalorder %s18, 0
      %p90 = por %p88, %p89
      %p91 = scmp.ne.s32.totalorder %s80, %s83
      %p92 = scmp.eq.s32.totalorder %s23, 2
      %p93 = por %p91, %p92
      %p94 = scmp.ne.s32.totalorder %s83, %s84
      %p95 = scmp.eq.s32.totalorder %s23, 0
      %p96 = por %p94, %p95
      %p97 = scmp.ne.s32.totalorder %s83, %s84
      %p98 = scmp.eq.s32.totalorder %s24, 2
      %p99 = por %p97, %p98
      %p101 = scmp.ne.s32.totalorder %s84, %s100
      %p102 = scmp.eq.s32.totalorder %s24, 0
      %p103 = por %p101, %p102
      %s105 = sadd.s32 %s104, 1
      %p108 = scmp.eq.s32.totalorder %s18, 2
      %p109 = scmp.ne.s32.totalorder %s104, %s106
      %p110 = scmp.eq.s32.totalorder %s18, 0
      %p111 = por %p109, %p110
      %p112 = scmp.ne.s32.totalorder %s104, %s106
      %p113 = scmp.eq.s32.totalorder %s23, 2
      %p114 = por %p112, %p113
      %p115 = scmp.ne.s32.totalorder %s106, %s107
      %p116 = scmp.eq.s32.totalorder %s23, 0
      %p117 = por %p115, %p116
      %p118 = scmp.ne.s32.totalorder %s106, %s107
      %p119 = scmp.eq.s32.totalorder %s24, 2
      %p120 = por %p118, %p119
      %p122 = scmp.ne.s32.totalorder %s107, %s121
      %p123 = scmp.eq.s32.totalorder %s24, 0
      %p124 = por %p122, %p123
      %s126 = sadd.s32 %s125, 1
      %p129 = scmp.eq.s32.totalorder %s18, 2
      %p130 = scmp.ne.s32.totalorder %s125, %s127
      %p131 = scmp.eq.s32.totalorder %s18, 0
      %p132 = por %p130, %p131
      %p133 = scmp.ne.s32.totalorder %s125, %s127
      %p134 = scmp.eq.s32.totalorder %s23, 2
      %p135 = por %p133, %p134
      %p136 = scmp.ne.s32.totalorder %s127, %s128
      %p137 = scmp.eq.s32.totalorder %s23, 0
      %p138 = por %p136, %p137
      %p139 = scmp.ne.s32.totalorder %s127, %s128
      %p140 = scmp.eq.s32.totalorder %s24, 2
      %p141 = por %p139, %p140
      %p143 = scmp.ne.s32.totalorder %s128, %s142
      %p144 = scmp.eq.s32.totalorder %s24, 0
      %p145 = por %p143, %p144
      %s147 = sadd.s32 %s146, 1
      %p150 = scmp.eq.s32.totalorder %s18, 2
      %p151 = scmp.ne.s32.totalorder %s146, %s148
      %p152 = scmp.eq.s32.totalorder %s18, 0
      %p153 = por %p151, %p152
      %p154 = scmp.ne.s32.totalorder %s146, %s148
      %p155 = scmp.eq.s32.totalorder %s23, 2
      %p156 = por %p154, %p155
      %p157 = scmp.ne.s32.totalorder %s148, %s149
      %p158 = scmp.eq.s32.totalorder %s23, 0
      %p159 = por %p157, %p158
      %p160 = scmp.ne.s32.totalorder %s148, %s149
      %p161 = scmp.eq.s32.totalorder %s24, 2
      %p162 = por %p160, %p161
      %p164 = scmp.ne.s32.totalorder %s149, %s163
      %p165 = scmp.eq.s32.totalorder %s24, 0
      %p166 = por %p164, %p165
      %s168 = sadd.s32 %s167, 1
      %p171 = scmp.eq.s32.totalorder %s18, 2
      %p172 = scmp.ne.s32.totalorder %s167, %s169
      %p173 = scmp.eq.s32.totalorder %s18, 0
      %p174 = por %p172, %p173
      %p175 = scmp.ne.s32.totalorder %s167, %s169
      %p176 = scmp.eq.s32.totalorder %s23, 2
      %p177 = por %p175, %p176
      %p178 = scmp.ne.s32.totalorder %s169, %s170
      %p179 = scmp.eq.s32.totalorder %s23, 0
      %p180 = por %p178, %p179
      %p181 = scmp.ne.s32.totalorder %s169, %s170
      %p182 = scmp.eq.s32.totalorder %s24, 2
      %p183 = por %p181, %p182
      %p185 = scmp.ne.s32.totalorder %s170, %s184
      %p186 = scmp.eq.s32.totalorder %s24, 0
      %p187 = por %p185, %p186
      %s188 = ssub.s32 %s18, %s25
      %p189 = scmp.eq.s32.totalorder %s188, 0
      %s191 = sadd.s32 %s190, 1
      %s192 = scalar_select %p189, %s190, %s191
      %p195 = pneg %p189
      %p196 = scmp.eq.s32.totalorder %s18, 2
      %p197 = por %p195, %p196
      %p198 = scmp.ne.s32.totalorder %s190, %s193
      %p199 = scmp.eq.s32.totalorder %s18, 0
      %p200 = por %p198, %p199
      %p201 = scmp.ne.s32.totalorder %s190, %s193
      %p202 = scmp.eq.s32.totalorder %s23, 2
      %p203 = por %p201, %p202
      %p204 = scmp.ne.s32.totalorder %s193, %s194
      %p205 = scmp.eq.s32.totalorder %s23, 0
      %p206 = por %p204, %p205
      %p207 = scmp.ne.s32.totalorder %s193, %s194
      %p208 = scmp.eq.s32.totalorder %s24, 2
      %p209 = por %p207, %p208
      %p211 = scmp.ne.s32.totalorder %s194, %s210
      %p212 = scmp.eq.s32.totalorder %s24, 0
      %p213 = por %p211, %p212
      %s214 = ssub.s32 %s18, %s25
      %p215 = scmp.eq.s32.totalorder %s214, 0
      %s217 = sadd.s32 %s216, 1
      %s218 = scalar_select %p215, %s216, %s217
      %p221 = pneg %p215
      %p222 = scmp.eq.s32.totalorder %s18, 2
      %p223 = por %p221, %p222
      %p224 = scmp.ne.s32.totalorder %s216, %s219
      %p225 = scmp.eq.s32.totalorder %s18, 0
      %p226 = por %p224, %p225
      %p227 = scmp.ne.s32.totalorder %s216, %s219
      %p228 = scmp.eq.s32.totalorder %s23, 2
      %p229 = por %p227, %p228
      %p230 = scmp.ne.s32.totalorder %s219, %s220
      %p231 = scmp.eq.s32.totalorder %s23, 0
      %p232 = por %p230, %p231
      %p233 = scmp.ne.s32.totalorder %s219, %s220
      %p234 = scmp.eq.s32.totalorder %s24, 2
      %p235 = por %p233, %p234
      %p237 = scmp.ne.s32.totalorder %s220, %s236
      %p238 = scmp.eq.s32.totalorder %s24, 0
      %p239 = por %p237, %p238
      %p240 = scmp.le.s32.totalorder 1, %s18
      %p241 = scmp.lt.s32.totalorder %s18, 4
      %p242 = pnand %p240, %p241
      %p243 = pneg %p242
      // Predicated region
      $region9: #{dgi_heter_forward.1} parent=5 // pred_check
        _
      $region10: #{dgi_heter_forward.1} parent=5 // pred_check_branch
        %245 = sbr.rel (%p242) target = $region12
      $region11: #{dgi_heter_forward.1} parent=5 // pred_region
        %s246 = ssub.s32 %s18, 1
        // Predicated region
        $region13: #{dgi_heter_forward.1} parent=11 // pred_check
          %p247 = pneg %p117
        $region14: #{dgi_heter_forward.1} parent=11 // pred_check_branch
          %249 = sbr.rel (%p247) target = $region16
        $region15: #{dgi_heter_forward.1} parent=11 // pred_region
          _
        $region16: #{dgi_heter_forward.1} parent=11 // pred_fallthru
          _
        // Predicated region
        $region17: #{dgi_heter_forward.1} parent=11 // pred_check
          %p250 = pneg %p138
        $region18: #{dgi_heter_forward.1} parent=11 // pred_check_branch
          %252 = sbr.rel (%p250) target = $region20
        $region19: #{dgi_heter_forward.1} parent=11 // pred_region
          %s254 = ssub.s32 16, 16
          %255 = vsyncadd [#allocation4], %s254
          %s257 = sshll.u32 %s4, 4
          %s258 = int_to_ptr.vmem [resolvable:$true] %s257
          %260 = dma.vmem_to_smem %s258, 16, [#allocation3], [#allocation4]
        $region20: #{dgi_heter_forward.1} parent=11 // pred_fallthru
          _
        // Predicated region
        $region21: #{dgi_heter_forward.1} parent=11 // pred_check
          %p261 = pneg %p159
        $region22: #{dgi_heter_forward.1} parent=11 // pred_check_branch
          %263 = sbr.rel (%p261) target = $region24
        $region23: #{dgi_heter_forward.1} parent=11 // pred_region
          %s265 = ssub.s32 16, 16
          %266 = vsyncadd [#allocation6], %s265
          %s268 = sshll.u32 %s5, 4
          %s269 = int_to_ptr.vmem [resolvable:$true] %s268
          %271 = dma.vmem_to_smem %s269, 16, [#allocation5], [#allocation6]
        $region24: #{dgi_heter_forward.1} parent=11 // pred_fallthru
          _
        // Predicated region
        $region25: #{dgi_heter_forward.1} parent=11 // pred_check
          %p272 = pneg %p180
        $region26: #{dgi_heter_forward.1} parent=11 // pred_check_branch
          %274 = sbr.rel (%p272) target = $region28
        $region27: #{dgi_heter_forward.1} parent=11 // pred_region
          _
        $region28: #{dgi_heter_forward.1} parent=11 // pred_fallthru
          _
      $region12: #{dgi_heter_forward.1} parent=5 // pred_fallthru
        _
      %p275 = scmp.lt.s32.totalorder %s18, 3
      // Predicated region
      $region29: #{dgi_heter_forward.1} parent=5 // pred_check
        %p276 = pneg %p275
      $region30: #{dgi_heter_forward.1} parent=5 // pred_check_branch
        %278 = sbr.rel (%p276) target = $region32
      $region31: #{dgi_heter_forward.1} parent=5 // pred_region
        // Predicated region
        $region33: #{dgi_heter_forward.1} parent=31 // pred_check
          %p279 = pneg %p38
        $region34: #{dgi_heter_forward.1} parent=31 // pred_check_branch
          %281 = sbr.rel (%p279) target = $region36
        $region35: #{dgi_heter_forward.1} parent=31 // pred_region
          %p282 = scmp.lt.s32.totalorder %s18, 2
          %s283 = scalar_select %p282, %s18, 2
          %s284 = smul.addr %s283, 16
          %s285 = smul.addr %s284, 4
          %s286 = scalar_lea.vmem %s0, %s285
        $region36: #{dgi_heter_forward.1} parent=31 // pred_fallthru
          _
        // Predicated region
        $region37: #{dgi_heter_forward.1} parent=31 // pred_check
          %p287 = pneg %p64
        $region38: #{dgi_heter_forward.1} parent=31 // pred_check_branch
          %289 = sbr.rel (%p287) target = $region40
        $region39: #{dgi_heter_forward.1} parent=31 // pred_region
          %p290 = scmp.lt.s32.totalorder %s18, 2
          %s291 = scalar_select %p290, %s18, 2
          %s292 = smul.addr %s291, 16
          %s293 = smul.addr %s292, 4
          %s294 = scalar_lea.vmem %s1, %s293
        $region40: #{dgi_heter_forward.1} parent=31 // pred_fallthru
          _
        // Predicated region
        $region41: #{dgi_heter_forward.1} parent=31 // pred_check
          %p295 = pneg %p90
        $region42: #{dgi_heter_forward.1} parent=31 // pred_check_branch
          %297 = sbr.rel (%p295) target = $region44
        $region43: #{dgi_heter_forward.1} parent=31 // pred_region
          %p298 = scmp.lt.s32.totalorder %s18, 2
          %s299 = scalar_select %p298, %s18, 2
          %s300 = scalar_lea.vmem %s2, %s299
        $region44: #{dgi_heter_forward.1} parent=31 // pred_fallthru
          _
      $region32: #{dgi_heter_forward.1} parent=5 // pred_fallthru
        _
      %p301 = scmp.le.s32.totalorder 1, %s18
      %p302 = scmp.lt.s32.totalorder %s18, 4
      %p303 = pnand %p301, %p302
      %p304 = pneg %p303
      // Predicated region
      $region45: #{dgi_heter_forward.1} parent=5 // pred_check
        _
      $region46: #{dgi_heter_forward.1} parent=5 // pred_check_branch
        %306 = sbr.rel (%p303) target = $region48
      $region47: #{dgi_heter_forward.1} parent=5 // pred_region
        %s307 = ssub.s32 %s18, 1
        // Predicated region
        $region49: #{dgi_heter_forward.1} parent=47 // pred_check
          %p308 = pneg %p138
        $region50: #{dgi_heter_forward.1} parent=47 // pred_check_branch
          %310 = sbr.rel (%p308) target = $region52
        $region51: #{dgi_heter_forward.1} parent=47 // pred_region
          %311 = dma.done [#allocation4], 16
        $region52: #{dgi_heter_forward.1} parent=47 // pred_fallthru
          _
        // Predicated region
        $region53: #{dgi_heter_forward.1} parent=47 // pred_check
          %p312 = pneg %p159
        $region54: #{dgi_heter_forward.1} parent=47 // pred_check_branch
          %314 = sbr.rel (%p312) target = $region56
        $region55: #{dgi_heter_forward.1} parent=47 // pred_region
          %315 = dma.done [#allocation6], 16
        $region56: #{dgi_heter_forward.1} parent=47 // pred_fallthru
          _
        %316 = sfence
        %p317 = scmp.lt.s32.totalorder %s23, 2
        %s318 = scalar_select %p317, %s23, 2
        %s319 = smul.addr %s318, 16
        %s320 = smul.addr %s319, 4
        %s321 = scalar_lea.vmem %s0, %s320
        %p322 = pneg %p44
        %p323 = pneg %p41
        %p324 = scmp.lt.s32.totalorder %s23, 2
        %s325 = scalar_select %p324, %s23, 2
        %s326 = smul.addr %s325, 16
        %s327 = smul.addr %s326, 4
        %s328 = scalar_lea.vmem %s1, %s327
        %p329 = pneg %p70
        %p330 = pneg %p67
        %p331 = scmp.lt.s32.totalorder %s23, 2
        %s332 = scalar_select %p331, %s23, 2
        %s333 = scalar_lea.vmem %s2, %s332
        %p334 = pneg %p96
        %p335 = pneg %p93
        %p336 = pneg %p117
        %p337 = pneg %p114
        %p338 = pneg %p138
        %p339 = pneg %p135
        %p340 = pneg %p159
        %p341 = pneg %p156
        %p342 = pneg %p180
        %p343 = pneg %p177
        %p344 = pneg %p206
        %p345 = pneg %p203
        %p346 = scmp.lt.s32.totalorder %s23, 2
        %s347 = scalar_select %p346, %s23, 2
        %s348 = scalar_lea.vmem %s7, %s347
        %p349 = pneg %p232
        %p350 = pneg %p229
        %p351 = scmp.lt.s32.totalorder %s23, 2
        %s352 = scalar_select %p351, %s23, 2
        %s353 = scalar_lea.vmem %s8, %s352
        %p354 = scmp.lt.s32.totalorder %s23, 2
        %s355 = scalar_select %p354, %s23, 2
        %s356 = smul.addr %s355, 16
        %s357 = smul.addr %s356, 4
        %s358 = scalar_lea.vmem %s0, %s357
        %p359 = scmp.lt.s32.totalorder %s23, 2
        %s360 = scalar_select %p359, %s23, 2
        %s361 = smul.addr %s360, 16
        %s362 = smul.addr %s361, 4
        %s363 = scalar_lea.vmem %s1, %s362
        %p364 = scmp.lt.s32.totalorder %s23, 2
        %s365 = scalar_select %p364, %s23, 2
        %s366 = scalar_lea.vmem %s2, %s365
        %p367 = scmp.lt.s32.totalorder %s23, 2
        %s368 = scalar_select %p367, %s23, 2
        %s369 = scalar_lea.vmem %s7, %s368
        %p370 = scmp.lt.s32.totalorder %s23, 2
        %s371 = scalar_select %p370, %s23, 2
        %s372 = scalar_lea.vmem %s8, %s371
        %s374 = sld [smem:[#allocation3 + %s23]]
        %s375 = sld [smem:[#allocation5 + %s23]]
        %s376 = sld [smem:[#allocation2]]
        %v377 = vld [vmem:[%s358] sm:$0xf]
        %v378 = vld [vmem:[%s358 + $0x4] sm:$0xf]
        %v379 = vld [vmem:[%s358 + $0x8] sm:$0xf]
        %v380 = vld [vmem:[%s358 + $0xc] sm:$0xf]
        %v381 = vld [vmem:[%s358 + $0x10] sm:$0xf]
        %v382 = vld [vmem:[%s358 + $0x14] sm:$0xf]
        %v383 = vld [vmem:[%s358 + $0x18] sm:$0xf]
        %v384 = vld [vmem:[%s358 + $0x1c] sm:$0xf]
        %v385 = vld [vmem:[%s358 + $0x20] sm:$0xf]
        %v386 = vld [vmem:[%s358 + $0x24] sm:$0xf]
        %v387 = vld [vmem:[%s358 + $0x28] sm:$0xf]
        %v388 = vld [vmem:[%s358 + $0x2c] sm:$0xf]
        %v389 = vld [vmem:[%s358 + $0x30] sm:$0xf]
        %v390 = vld [vmem:[%s358 + $0x34] sm:$0xf]
        %v391 = vld [vmem:[%s358 + $0x38] sm:$0xf]
        %v392 = vld [vmem:[%s358 + $0x3c] sm:$0xf]
        %v393 = vld [vmem:[%s363] sm:$0xf]
        %v394 = vld [vmem:[%s363 + $0x4] sm:$0xf]
        %v395 = vld [vmem:[%s363 + $0x8] sm:$0xf]
        %v396 = vld [vmem:[%s363 + $0xc] sm:$0xf]
        %v397 = vld [vmem:[%s363 + $0x10] sm:$0xf]
        %v398 = vld [vmem:[%s363 + $0x14] sm:$0xf]
        %v399 = vld [vmem:[%s363 + $0x18] sm:$0xf]
        %v400 = vld [vmem:[%s363 + $0x1c] sm:$0xf]
        %v401 = vld [vmem:[%s363 + $0x20] sm:$0xf]
        %v402 = vld [vmem:[%s363 + $0x24] sm:$0xf]
        %v403 = vld [vmem:[%s363 + $0x28] sm:$0xf]
        %v404 = vld [vmem:[%s363 + $0x2c] sm:$0xf]
        %v405 = vld [vmem:[%s363 + $0x30] sm:$0xf]
        %v406 = vld [vmem:[%s363 + $0x34] sm:$0xf]
        %v407 = vld [vmem:[%s363 + $0x38] sm:$0xf]
        %v408 = vld [vmem:[%s363 + $0x3c] sm:$0xf]
        %v409 = vlaneseq
        %v410 = vand.u32 %v409, 127
        %v411 = vstv %s374
        %vm412 = vcmp.lt.s32.totalorder %v410, %v411
        %v413 = vsel %vm412, 1.0, 0.0
        %v414 = vpack.c.bf16 %v413, %v413
        %v431 = vunpack.c.l.b16 %v377
        %v432 = vunpack.c.l.b16 %v378
        %v433 = vunpack.c.l.b16 %v379
        %v434 = vunpack.c.l.b16 %v380
        %v435 = vunpack.c.l.b16 %v381
        %v436 = vunpack.c.l.b16 %v382
        %v437 = vunpack.c.l.b16 %v383
        %v438 = vunpack.c.l.b16 %v384
        %v439 = vunpack.c.l.b16 %v385
        %v440 = vunpack.c.l.b16 %v386
        %v441 = vunpack.c.l.b16 %v387
        %v442 = vunpack.c.l.b16 %v388
        %v443 = vunpack.c.l.b16 %v389
        %v444 = vunpack.c.l.b16 %v390
        %v445 = vunpack.c.l.b16 %v391
        %v446 = vunpack.c.l.b16 %v392
        %v447 = vpack.c.b16 %v432, %v431
        %v448 = vpack.c.b16 %v434, %v433
        %v449 = vpack.c.b16 %v436, %v435
        %v450 = vpack.c.b16 %v438, %v437
        %v451 = vpack.c.b16 %v440, %v439
        %v452 = vpack.c.b16 %v442, %v441
        %v453 = vpack.c.b16 %v444, %v443
        %v454 = vpack.c.b16 %v446, %v445
        %463 = vmatprep.subr.bf16.mxu0 0
        %464 = vmatpush1.bf16.msra.mxu0 %v447
        %465 = vmatprep.subr.bf16.mxu0 0
        %466 = vmatpush1.bf16.msra.mxu0 %v448
        %467 = vmatprep.subr.bf16.mxu0 0
        %468 = vmatpush1.bf16.msra.mxu0 %v449
        %469 = vmatprep.subr.bf16.mxu0 0
        %470 = vmatpush1.bf16.msra.mxu0 %v450
        %471 = vmatprep.subr.bf16.mxu0 0
        %472 = vmatpush1.bf16.msra.mxu0 %v451
        %473 = vmatprep.subr.bf16.mxu0 0
        %474 = vmatpush1.bf16.msra.mxu0 %v452
        %475 = vmatprep.subr.bf16.mxu0 0
        %476 = vmatpush1.bf16.msra.mxu0 %v453
        %477 = vmatprep.subr.bf16.mxu0 0
        %478 = vmatpush1.bf16.msra.mxu0 %v454
        %479 = vmatprep.subr.bf16.mxu0 0
        %480 = vmatpush1.bf16.msra.mxu0 0
        %481 = vmatprep.subr.bf16.mxu0 0
        %482 = vmatpush1.bf16.msra.mxu0 0
        %483 = vmatprep.subr.bf16.mxu0 0
        %484 = vmatpush1.bf16.msra.mxu0 0
        %485 = vmatprep.subr.bf16.mxu0 0
        %486 = vmatpush1.bf16.msra.mxu0 0
        %487 = vmatprep.subr.bf16.mxu0 0
        %488 = vmatpush1.bf16.msra.mxu0 0
        %489 = vmatprep.subr.bf16.mxu0 0
        %490 = vmatpush1.bf16.msra.mxu0 0
        %491 = vmatprep.subr.bf16.mxu0 0
        %492 = vmatpush1.bf16.msra.mxu0 0
        %493 = vmatprep.subr.bf16.mxu0 0
        %494 = vmatpush1.bf16.msra.mxu0 0
        %495 = vmatprep.mubr.bf16.mxu0 0
        %496 = vmatmul.mubr.bf16.gmra.mrb[0].mxu0 %v414
        %v497 = vpop.f32.mrb[0].mxu0
        %v498 = vadd.f32 0.0, %v497
        %v499 = vpop.f32.mrb[0].mxu0
        %v500 = vpop.f32.mrb[0].mxu0
        %v501 = vpop.f32.mrb[0].mxu0
        %502 = vdwg.mxu0
        %v503 = vstv %s375
        %v504 = vmul.f32 %v498, %v503
        %v505 = vxor.u32 %v504, 2147483648
        %v506 = vmul.f32 %v505, 1.442695
        %v507 = vpow.pop %v506
        %v508 = vadd.f32 %v507, 1.0
        %v509 = vrcp.pop %v508
        %v510 = vmul.f32 1.0, %v509
        %v511 = vld [vmem:[%s3] sm:$0xff]
        %v512 = vld [vmem:[%s3 + $0x8] sm:$0xff]
        %v513 = vld [vmem:[%s3 + $0x10] sm:$0xff]
        %v514 = vld [vmem:[%s3 + $0x18] sm:$0xff]
        %vm515 = vcmask 261120
        %v517 = vsel %vm515, %v510, 0
        %v520 = vsel %vm515, %v511, 0
        %v523 = vsel %vm515, %v512, 0
        %v526 = vsel %vm515, %v513, 0
        %v529 = vsel %vm515, %v514, 0
        %531 = vmatprep.subr.mxu0 0.0
        %532 = vmatpush1.xpose.msra.mxu0 %v520
        %533 = vmatprep.subr.mxu0 0.0
        %534 = vmatpush1.xpose.msra.mxu0 %v523
        %535 = vmatprep.subr.mxu0 0.0
        %536 = vmatpush1.xpose.msra.mxu0 %v526
        %537 = vmatprep.subr.mxu0 0.0
        %538 = vmatpush1.xpose.msra.mxu0 %v529
        %539 = vmatprep.subr.mxu0 0.0
        %540 = vmatpush1.xpose.msra.mxu0 0.0
        %541 = vmatprep.subr.mxu0 0.0
        %542 = vmatpush1.xpose.msra.mxu0 0.0
        %543 = vmatprep.subr.mxu0 0.0
        %544 = vmatpush1.xpose.msra.mxu0 0.0
        %545 = vmatprep.subr.mxu0 0.0
        %546 = vmatpush1.xpose.msra.mxu0 0.0
        %547 = vmatprep.subr.mxu0 0.0
        %548 = vmatpush1.xpose.msra.mxu0 0.0
        %549 = vmatprep.subr.mxu0 0.0
        %550 = vmatpush1.xpose.msra.mxu0 0.0
        %551 = vmatprep.subr.mxu0 0.0
        %552 = vmatpush1.xpose.msra.mxu0 0.0
        %553 = vmatprep.subr.mxu0 0.0
        %554 = vmatpush1.xpose.msra.mxu0 0.0
        %555 = vmatprep.subr.mxu0 0.0
        %556 = vmatpush1.xpose.msra.mxu0 0.0
        %557 = vmatprep.subr.mxu0 0.0
        %558 = vmatpush1.xpose.msra.mxu0 0.0
        %559 = vmatprep.subr.mxu0 0.0
        %560 = vmatpush1.xpose.msra.mxu0 0.0
        %561 = vmatprep.subr.mxu0 0.0
        %562 = vmatpush1.xpose.msra.mxu0 0.0
        %563 = vmatprep.subr.mxu0 0.0
        %564 = vmatpush1.xpose.msra.mxu0 0.0
        %565 = vmatprep.subr.mxu0 0.0
        %566 = vmatpush1.xpose.msra.mxu0 0.0
        %567 = vmatprep.subr.mxu0 0.0
        %568 = vmatpush1.xpose.msra.mxu0 0.0
        %569 = vmatprep.subr.mxu0 0.0
        %570 = vmatpush1.xpose.msra.mxu0 0.0
        %571 = vmatprep.subr.mxu0 0.0
        %572 = vmatpush1.xpose.msra.mxu0 0.0
        %573 = vmatprep.subr.mxu0 0.0
        %574 = vmatpush1.xpose.msra.mxu0 0.0
        %575 = vmatprep.subr.mxu0 0.0
        %576 = vmatpush1.xpose.msra.mxu0 0.0
        %577 = vmatprep.subr.mxu0 0.0
        %578 = vmatpush1.xpose.msra.mxu0 0.0
        %579 = vmatprep.subr.mxu0 0.0
        %580 = vmatpush1.xpose.msra.mxu0 0.0
        %581 = vmatprep.subr.mxu0 0.0
        %582 = vmatpush1.xpose.msra.mxu0 0.0
        %583 = vmatprep.subr.mxu0 0.0
        %584 = vmatpush1.xpose.msra.mxu0 0.0
        %585 = vmatprep.subr.mxu0 0.0
        %586 = vmatpush1.xpose.msra.mxu0 0.0
        %587 = vmatprep.subr.mxu0 0.0
        %588 = vmatpush1.xpose.msra.mxu0 0.0
        %589 = vmatprep.subr.mxu0 0.0
        %590 = vmatpush1.xpose.msra.mxu0 0.0
        %591 = vmatprep.subr.mxu0 0.0
        %592 = vmatpush1.xpose.msra.mxu0 0.0
        %593 = vmatprep.subr.mxu0 0.0
        %594 = vmatpush1.xpose.msra.mxu0 0.0
        %595 = vmatprep.mubr.f32.mxu0 0.0
        %596 = vmatmul.mubr.f32.gmra.mrb[0].mxu0 %v517
        %v597 = vpop.f32.mrb[0].mxu0
        %v598 = vadd.f32 0.0, %v597
        %v599 = vpop.f32.mrb[0].mxu0
        %600 = vdwg.mxu0
        %v601 = vld [vmem:[%s366] sm:$0x1]
        %v602 = vunpack.c.l.bf16 %v601
        %v603 = vmul.f32 %v602, %v598
        %v604 = vpack.c.bf16 %v603, %v603
        %v605 = vstv %s376
        %v607 = vsel %vm515, %v604, 0
        %v610 = vsel %vm515, %v447, 0
        %v613 = vsel %vm515, %v448, 0
        %v616 = vsel %vm515, %v449, 0
        %v619 = vsel %vm515, %v450, 0
        %v622 = vsel %vm515, %v451, 0
        %v625 = vsel %vm515, %v452, 0
        %v628 = vsel %vm515, %v453, 0
        %v631 = vsel %vm515, %v454, 0
        %633 = vmatprep.subr.bf16.mxu0 0
        %634 = vmatpush1.bf16.xpose.msra.mxu0 %v610
        %635 = vmatprep.subr.bf16.mxu0 0
        %636 = vmatpush1.bf16.xpose.msra.mxu0 %v613
        %637 = vmatprep.subr.bf16.mxu0 0
        %638 = vmatpush1.bf16.xpose.msra.mxu0 %v616
        %639 = vmatprep.subr.bf16.mxu0 0
        %640 = vmatpush1.bf16.xpose.msra.mxu0 %v619
        %641 = vmatprep.subr.bf16.mxu0 0
        %642 = vmatpush1.bf16.xpose.msra.mxu0 %v622
        %643 = vmatprep.subr.bf16.mxu0 0
        %644 = vmatpush1.bf16.xpose.msra.mxu0 %v625
        %645 = vmatprep.subr.bf16.mxu0 0
        %646 = vmatpush1.bf16.xpose.msra.mxu0 %v628
        %647 = vmatprep.subr.bf16.mxu0 0
        %648 = vmatpush1.bf16.xpose.msra.mxu0 %v631
        %649 = vmatprep.subr.bf16.mxu0 0
        %650 = vmatpush1.bf16.xpose.msra.mxu0 0
        %651 = vmatprep.subr.bf16.mxu0 0
        %652 = vmatpush1.bf16.xpose.msra.mxu0 0
        %653 = vmatprep.subr.bf16.mxu0 0
        %654 = vmatpush1.bf16.xpose.msra.mxu0 0
        %655 = vmatprep.subr.bf16.mxu0 0
        %656 = vmatpush1.bf16.xpose.msra.mxu0 0
        %657 = vmatprep.subr.bf16.mxu0 0
        %658 = vmatpush1.bf16.xpose.msra.mxu0 0
        %659 = vmatprep.subr.bf16.mxu0 0
        %660 = vmatpush1.bf16.xpose.msra.mxu0 0
        %661 = vmatprep.subr.bf16.mxu0 0
        %662 = vmatpush1.bf16.xpose.msra.mxu0 0
        %663 = vmatprep.subr.bf16.mxu0 0
        %664 = vmatpush1.bf16.xpose.msra.mxu0 0
        %665 = vmatprep.mubr.bf16.mxu0 0
        %666 = vmatmul.mubr.bf16.gmra.mrb[0].mxu0 %v607
        %v667 = vpop.f32.mrb[0].mxu0
        %v668 = vadd.f32 %v605, %v667
        %v669 = vpop.f32.mrb[0].mxu0
        %v670 = vpop.f32.mrb[0].mxu0
        %v671 = vpop.f32.mrb[0].mxu0
        %672 = vdwg.mxu0
        %673 = vst [vmem:[%s369] sm:$0x1] %v668
        %v690 = vunpack.c.l.b16 %v393
        %v691 = vunpack.c.l.b16 %v394
        %v692 = vunpack.c.l.b16 %v395
        %v693 = vunpack.c.l.b16 %v396
        %v694 = vunpack.c.l.b16 %v397
        %v695 = vunpack.c.l.b16 %v398
        %v696 = vunpack.c.l.b16 %v399
        %v697 = vunpack.c.l.b16 %v400
        %v698 = vunpack.c.l.b16 %v401
        %v699 = vunpack.c.l.b16 %v402
        %v700 = vunpack.c.l.b16 %v403
        %v701 = vunpack.c.l.b16 %v404
        %v702 = vunpack.c.l.b16 %v405
        %v703 = vunpack.c.l.b16 %v406
        %v704 = vunpack.c.l.b16 %v407
        %v705 = vunpack.c.l.b16 %v408
        %v706 = vpack.c.b16 %v691, %v690
        %v707 = vpack.c.b16 %v693, %v692
        %v708 = vpack.c.b16 %v695, %v694
        %v709 = vpack.c.b16 %v697, %v696
        %v710 = vpack.c.b16 %v699, %v698
        %v711 = vpack.c.b16 %v701, %v700
        %v712 = vpack.c.b16 %v703, %v702
        %v713 = vpack.c.b16 %v705, %v704
        %v715 = vsel %vm515, %v706, 0
        %v718 = vsel %vm515, %v707, 0
        %v721 = vsel %vm515, %v708, 0
        %v724 = vsel %vm515, %v709, 0
        %v727 = vsel %vm515, %v710, 0
        %v730 = vsel %vm515, %v711, 0
        %v733 = vsel %vm515, %v712, 0
        %v736 = vsel %vm515, %v713, 0
        %738 = vmatprep.subr.bf16.mxu0 0
        %739 = vmatpush1.bf16.xpose.msra.mxu0 %v715
        %740 = vmatprep.subr.bf16.mxu0 0
        %741 = vmatpush1.bf16.xpose.msra.mxu0 %v718
        %742 = vmatprep.subr.bf16.mxu0 0
        %743 = vmatpush1.bf16.xpose.msra.mxu0 %v721
        %744 = vmatprep.subr.bf16.mxu0 0
        %745 = vmatpush1.bf16.xpose.msra.mxu0 %v724
        %746 = vmatprep.subr.bf16.mxu0 0
        %747 = vmatpush1.bf16.xpose.msra.mxu0 %v727
        %748 = vmatprep.subr.bf16.mxu0 0
        %749 = vmatpush1.bf16.xpose.msra.mxu0 %v730
        %750 = vmatprep.subr.bf16.mxu0 0
        %751 = vmatpush1.bf16.xpose.msra.mxu0 %v733
        %752 = vmatprep.subr.bf16.mxu0 0
        %753 = vmatpush1.bf16.xpose.msra.mxu0 %v736
        %754 = vmatprep.subr.bf16.mxu0 0
        %755 = vmatpush1.bf16.xpose.msra.mxu0 0
        %756 = vmatprep.subr.bf16.mxu0 0
        %757 = vmatpush1.bf16.xpose.msra.mxu0 0
        %758 = vmatprep.subr.bf16.mxu0 0
        %759 = vmatpush1.bf16.xpose.msra.mxu0 0
        %760 = vmatprep.subr.bf16.mxu0 0
        %761 = vmatpush1.bf16.xpose.msra.mxu0 0
        %762 = vmatprep.subr.bf16.mxu0 0
        %763 = vmatpush1.bf16.xpose.msra.mxu0 0
        %764 = vmatprep.subr.bf16.mxu0 0
        %765 = vmatpush1.bf16.xpose.msra.mxu0 0
        %766 = vmatprep.subr.bf16.mxu0 0
        %767 = vmatpush1.bf16.xpose.msra.mxu0 0
        %768 = vmatprep.subr.bf16.mxu0 0
        %769 = vmatpush1.bf16.xpose.msra.mxu0 0
        %770 = vmatprep.mubr.bf16.mxu0 0
        %771 = vmatmul.mubr.bf16.gmra.mrb[0].mxu0 %v607
        %v772 = vpop.f32.mrb[0].mxu0
        %v773 = vadd.f32 %v605, %v772
        %v774 = vpop.f32.mrb[0].mxu0
        %v775 = vpop.f32.mrb[0].mxu0
        %v776 = vpop.f32.mrb[0].mxu0
        %777 = vdwg.mxu0
        %778 = vst [vmem:[%s372] sm:$0x1] %v773
        %p779 = scmp.lt.s32.totalorder %s23, 2
        %s780 = scalar_select %p779, %s23, 2
        %s781 = scalar_lea.vmem %s7, %s780
        %p782 = scmp.lt.s32.totalorder %s23, 2
        %s783 = scalar_select %p782, %s23, 2
        %s784 = scalar_lea.vmem %s8, %s783
        // Predicated region
        $region57: #{dgi_heter_forward.1} parent=47 // pred_check
          %p785 = pneg %p203
        $region58: #{dgi_heter_forward.1} parent=47 // pred_check_branch
          %787 = sbr.rel (%p785) target = $region60
        $region59: #{dgi_heter_forward.1} parent=47 // pred_region
          _
        $region60: #{dgi_heter_forward.1} parent=47 // pred_fallthru
          _
        // Predicated region
        $region61: #{dgi_heter_forward.1} parent=47 // pred_check
          %p788 = pneg %p229
        $region62: #{dgi_heter_forward.1} parent=47 // pred_check_branch
          %790 = sbr.rel (%p788) target = $region64
        $region63: #{dgi_heter_forward.1} parent=47 // pred_region
          _
        $region64: #{dgi_heter_forward.1} parent=47 // pred_fallthru
          _
      $region48: #{dgi_heter_forward.1} parent=5 // pred_fallthru
        _
      %p791 = scmp.le.s32.totalorder 2, %s18
      // Predicated region
      $region65: #{dgi_heter_forward.1} parent=5 // pred_check
        %p792 = pneg %p791
      $region66: #{dgi_heter_forward.1} parent=5 // pred_check_branch
        %794 = sbr.rel (%p792) target = $region68
      $region67: #{dgi_heter_forward.1} parent=5 // pred_region
        %s795 = ssub.s32 %s18, 2
        // Predicated region
        $region69: #{dgi_heter_forward.1} parent=67 // pred_check
          %p796 = pneg %p209
        $region70: #{dgi_heter_forward.1} parent=67 // pred_check_branch
          %798 = sbr.rel (%p796) target = $region72
        $region71: #{dgi_heter_forward.1} parent=67 // pred_region
          %p799 = scmp.lt.s32.totalorder %s24, 2
          %s800 = scalar_select %p799, %s24, 2
          %s801 = scalar_lea.vmem %s7, %s800
        $region72: #{dgi_heter_forward.1} parent=67 // pred_fallthru
          _
        // Predicated region
        $region73: #{dgi_heter_forward.1} parent=67 // pred_check
          %p802 = pneg %p235
        $region74: #{dgi_heter_forward.1} parent=67 // pred_check_branch
          %804 = sbr.rel (%p802) target = $region76
        $region75: #{dgi_heter_forward.1} parent=67 // pred_region
          %p805 = scmp.lt.s32.totalorder %s24, 2
          %s806 = scalar_select %p805, %s24, 2
          %s807 = scalar_lea.vmem %s8, %s806
        $region76: #{dgi_heter_forward.1} parent=67 // pred_fallthru
          _
      $region68: #{dgi_heter_forward.1} parent=5 // pred_fallthru
        _
    $region6: #{dgi_heter_forward.1} parent=1 // loop_footer
      %s22 = sadd.s32 1, %s18
    $region7: #{dgi_heter_forward.1} parent=1 // loop_footer_branch
      %17 = sbr.rel target = $region3
    $region8: #{dgi_heter_forward.1} parent=1 // loop_exit
      _
    %808 = vsyncpa [#allocation4], 1
    %s809 = scalar_lea.sflag [#allocation4], 1
    %810 = vsyncpa %s809, 1
    %811 = vsyncpa [#allocation6], 1

</llo_original>
